<compile_context>
chip_gen: v5e
topology: v5e:2x2
jax: 0.10.0
libtpu: 0.0.40
codegen_flags: <defaults>
</compile_context>

<pallas_src>
import math

import jax
import jax.numpy as jnp
from jax.experimental import pallas as pl
from jax.experimental.pallas import tpu as pltpu


def compute_shifts(octave_bins, undertones, overtones):
    """Same shift computation as HarmonicStacking.__init__ (Python round incl.)."""
    harmonics = [1.0 / (x + 2) for x in range(undertones)] + list(
        range(1, overtones + 1)
    )
    # Note: Python round() (banker's rounding) — identical to the torch ctor.
    return [round(octave_bins * math.log2(h)) for h in harmonics]


def _make_hstack_kernel(shifts, C, W):
    """Kernel over one (C, TH, W) input block -> (C*S, TH, W) output block."""
    shifts = tuple(int(s) for s in shifts)

    def kernel(x_ref, o_ref):
        x = x_ref[...]                                   # (C, TH, W) slab
        zero = jnp.zeros((), x.dtype)
        # Lane-index row built once; per-shift masks against the TRUE W.
        col = jax.lax.broadcasted_iota(jnp.int32, (1, 1, W), 2)
        for i, s in enumerate(shifts):
            if s == 0:
                o_ref[pl.ds(i * C, C)] = x
            else:
                # out[..., w] = x[..., w + s] when 0 <= w + s < W else 0.
                # pltpu.roll matches np.roll, so rolling by (-s) % W aligns the
                # sources; wrapped lanes are zeroed by the mask.
                src = col + s
                mask = (src >= 0) & (src < W)
                rolled = pltpu.roll(x, (-s) % W, axis=2)
                o_ref[pl.ds(i * C, C)] = jnp.where(mask, rolled, zero)

    return kernel


def _sublane_multiple(dtype):
    """Sublane packing multiple: 8 for f32, 16 for bf16, 32 for int8/fp8."""
    return max(8, 32 // jnp.dtype(dtype).itemsize)


def _vmem_budgets():
    """Generation-aware (tile_budget, vmem_limit) derived from actual VMEM size."""
    try:
        cap = int(pltpu.get_tpu_info().vmem_capacity_bytes)
    except Exception:  # pragma: no cover - conservative fallback
        cap = 64 * 1024 * 1024
    # v5e/v6e (128 MiB): tile budget 64 MiB, limit 110 MiB.
    # v7x (64 MiB / TC): tile budget 32 MiB, limit 48 MiB.
    tile_budget = min(cap // 2, 64 * 1024 * 1024)
    vmem_limit = min(cap - 16 * 1024 * 1024, 110 * 1024 * 1024)
    return tile_budget, vmem_limit


def _choose_time_tile(B, H, C, W, S, itemsize, sub, tile_budget):
    """Largest sublane-aligned time tile fitting the double-buffered VMEM budget,
    while keeping >= 2 parallel grid steps when B == 1 (v7x megacore)."""
    bytes_per_row = 2 * (1 + S) * C * W * itemsize       # 2 bufs x (in + S*out)
    max_rows = max(sub, tile_budget // bytes_per_row)
    th = min(H, max_rows)
    if B < 2 and H > sub:
        th = min(th, -(-H // 2))                         # cdiv(H, 2): >=2 steps
    if th >= H:
        return H                                         # full extent -> legal.
    return max(sub, (th // sub) * sub)


def harmonic_stacking(x, octave_bins, undertones, overtones):
    """Pallas implementation of HarmonicStacking.forward for NCHW input."""
    shifts = compute_shifts(octave_bins, undertones, overtones)
    B, C, H, W = x.shape
    S = len(shifts)
    itemsize = jnp.dtype(x.dtype).itemsize

    tile_budget, vmem_limit = _vmem_budgets()
    sub = _sublane_multiple(x.dtype)
    TH = _choose_time_tile(B, H, C, W, S, itemsize, sub, tile_budget)

    kernel = _make_hstack_kernel(shifts, C, W)

    bytes_accessed = (1 + S) * B * C * H * W * itemsize

    out = pl.pallas_call(
        kernel,
        out_shape=jax.ShapeDtypeStruct((B, C * S, H, W), x.dtype),
        grid_spec=pl.GridSpec(
            grid=(B, pl.cdiv(H, TH)),
            in_specs=[
                pl.BlockSpec((None, C, TH, W), lambda b, h: (b, 0, h, 0)),
            ],
            out_specs=pl.BlockSpec(
                (None, C * S, TH, W), lambda b, h: (b, 0, h, 0)
            ),
        ),
        compiler_params=pltpu.CompilerParams(
            dimension_semantics=("parallel", "parallel"),
            vmem_limit_bytes=vmem_limit,
        ),
        cost_estimate=pl.CostEstimate(
            flops=0, transcendentals=0, bytes_accessed=bytes_accessed
        ),
    )(x)
    return out


def harmonic_stacking_ref(x, octave_bins, undertones, overtones):
    """Pure-JAX reference mirroring the PyTorch forward exactly."""
    shifts = compute_shifts(octave_bins, undertones, overtones)
    chans = []
    for s in shifts:
        if s == 0:
            padded = x
        elif s > 0:
            padded = jnp.pad(x[..., s:], ((0, 0), (0, 0), (0, 0), (0, s)))
        else:
            padded = jnp.pad(x[..., :s], ((0, 0), (0, 0), (0, 0), (-s, 0)))
        chans.append(padded)
    return jnp.concatenate(chans, axis=1)


if __name__ == "__main__":
    # HarmonicStacking has no learned parameters; only static shift config.
    octave_bins, undertones, overtones = 12, 2, 3  # shifts = [-12, -19, 0, 12, 19]

    # Non-multiple-of-128 freq bins exercises the masked-tail-store path
    # (no HBM padding anymore); C=2 exercises the collapsed channel slab.
    B, C, H, W = 2, 2, 16, 264  # (batch, channels, time frames, freq bins)
    key = jax.random.PRNGKey(0)
    x = jax.random.normal(key, (B, C, H, W), dtype=jnp.float32)

    out = harmonic_stacking(x, octave_bins, undertones, overtones)
    out = jax.block_until_ready(out)

    ref = harmonic_stacking_ref(x, octave_bins, undertones, overtones)
    assert out.shape == ref.shape, (out.shape, ref.shape)
    assert jnp.allclose(out, ref), "Pallas output mismatch vs reference"

    print("KERNEL_OK")
</pallas_src>

<mosaic_0001>
module attributes {stable_mosaic.version = 11 : i64} {
  func.func @kernel(%arg0: i32, %arg1: i32, %arg2: memref<1x2x16x264xf32, #tpu.memory_space<vmem>>, %arg3: memref<1x10x16x264xf32, #tpu.memory_space<vmem>>) attributes {dimension_semantics = [#tpu.dimension_semantics<parallel>, #tpu.dimension_semantics<parallel>], iteration_bounds = array<i64: 2, 1>, scalar_prefetch = 0 : i64, scratch_operands = 0 : i64, tpu.core_type = #tpu.core_type<tc>, window_params = [{transform_indices = @transform_0, window_bounds = array<i64: 1, 2, 16, 264>}, {transform_indices = @transform_1, window_bounds = array<i64: 1, 10, 16, 264>}]} {
    %c0 = arith.constant 0 : index
    %c0_0 = arith.constant 0 : index
    %c0_1 = arith.constant 0 : index
    %c0_2 = arith.constant 0 : index
    %0 = vector.load %arg2[%c0, %c0_0, %c0_1, %c0_2] : memref<1x2x16x264xf32, #tpu.memory_space<vmem>>, vector<1x2x16x264xf32>
    %1 = vector.shape_cast %0 : vector<1x2x16x264xf32> to vector<2x16x264xf32>
    %2 = tpu.iota {dimensions = array<i32: 2>} : vector<1x1x264xi32>
    %c-12_i32 = arith.constant -12 : i32
    %3 = vector.broadcast %c-12_i32 : i32 to vector<1x1x264xi32>
    %4 = arith.addi %2, %3 : vector<1x1x264xi32>
    %c0_i32 = arith.constant 0 : i32
    %5 = vector.broadcast %c0_i32 : i32 to vector<1x1x264xi32>
    %6 = arith.cmpi sge, %4, %5 : vector<1x1x264xi32>
    %c264_i32 = arith.constant 264 : i32
    %7 = vector.broadcast %c264_i32 : i32 to vector<1x1x264xi32>
    %8 = arith.cmpi slt, %4, %7 : vector<1x1x264xi32>
    %9 = arith.andi %6, %8 : vector<1x1x264xi1>
    %c12_i32 = arith.constant 12 : i32
    %10 = tpu.dynamic_rotate %1 by %c12_i32 dim 2 : vector<2x16x264xf32>, i32 -> vector<2x16x264xf32>
    %cst = arith.constant 0.000000e+00 : f32
    %11 = vector.shape_cast %9 : vector<1x1x264xi1> to vector<1x1x264xi1>
    %12 = vector.broadcast %11 : vector<1x1x264xi1> to vector<2x16x264xi1>
    %13 = vector.broadcast %cst : f32 to vector<2x16x264xf32>
    %14 = arith.select %12, %10, %13 : vector<2x16x264xi1>, vector<2x16x264xf32>
    %c0_3 = arith.constant 0 : index
    %c0_4 = arith.constant 0 : index
    %c0_5 = arith.constant 0 : index
    %c0_6 = arith.constant 0 : index
    %15 = vector.load %arg3[%c0_3, %c0_4, %c0_5, %c0_6] : memref<1x10x16x264xf32, #tpu.memory_space<vmem>>, vector<1x2x16x264xf32>
    %16 = vector.shape_cast %15 : vector<1x2x16x264xf32> to vector<2x16x264xf32>
    %17 = vector.shape_cast %14 : vector<2x16x264xf32> to vector<1x2x16x264xf32>
    tpu.vector_store %arg3[%c0_3, %c0_4, %c0_5, %c0_6], %17 {strides = array<i32>} : memref<1x10x16x264xf32, #tpu.memory_space<vmem>>, vector<1x2x16x264xf32>,
    %c-19_i32 = arith.constant -19 : i32
    %18 = vector.broadcast %c-19_i32 : i32 to vector<1x1x264xi32>
    %19 = arith.addi %2, %18 : vector<1x1x264xi32>
    %c0_i32_7 = arith.constant 0 : i32
    %20 = vector.broadcast %c0_i32_7 : i32 to vector<1x1x264xi32>
    %21 = arith.cmpi sge, %19, %20 : vector<1x1x264xi32>
    %c264_i32_8 = arith.constant 264 : i32
    %22 = vector.broadcast %c264_i32_8 : i32 to vector<1x1x264xi32>
    %23 = arith.cmpi slt, %19, %22 : vector<1x1x264xi32>
    %24 = arith.andi %21, %23 : vector<1x1x264xi1>
    %c19_i32 = arith.constant 19 : i32
    %25 = tpu.dynamic_rotate %1 by %c19_i32 dim 2 : vector<2x16x264xf32>, i32 -> vector<2x16x264xf32>
    %cst_9 = arith.constant 0.000000e+00 : f32
    %26 = vector.shape_cast %24 : vector<1x1x264xi1> to vector<1x1x264xi1>
    %27 = vector.broadcast %26 : vector<1x1x264xi1> to vector<2x16x264xi1>
    %28 = vector.broadcast %cst_9 : f32 to vector<2x16x264xf32>
    %29 = arith.select %27, %25, %28 : vector<2x16x264xi1>, vector<2x16x264xf32>
    %c0_10 = arith.constant 0 : index
    %c2 = arith.constant 2 : index
    %c0_11 = arith.constant 0 : index
    %c0_12 = arith.constant 0 : index
    %30 = vector.load %arg3[%c0_10, %c2, %c0_11, %c0_12] : memref<1x10x16x264xf32, #tpu.memory_space<vmem>>, vector<1x2x16x264xf32>
    %31 = vector.shape_cast %30 : vector<1x2x16x264xf32> to vector<2x16x264xf32>
    %32 = vector.shape_cast %29 : vector<2x16x264xf32> to vector<1x2x16x264xf32>
    tpu.vector_store %arg3[%c0_10, %c2, %c0_11, %c0_12], %32 {strides = array<i32>} : memref<1x10x16x264xf32, #tpu.memory_space<vmem>>, vector<1x2x16x264xf32>,
    %c0_13 = arith.constant 0 : index
    %c4 = arith.constant 4 : index
    %c0_14 = arith.constant 0 : index
    %c0_15 = arith.constant 0 : index
    %33 = vector.load %arg3[%c0_13, %c4, %c0_14, %c0_15] : memref<1x10x16x264xf32, #tpu.memory_space<vmem>>, vector<1x2x16x264xf32>
    %34 = vector.shape_cast %33 : vector<1x2x16x264xf32> to vector<2x16x264xf32>
    %35 = vector.shape_cast %1 : vector<2x16x264xf32> to vector<1x2x16x264xf32>
    tpu.vector_store %arg3[%c0_13, %c4, %c0_14, %c0_15], %35 {strides = array<i32>} : memref<1x10x16x264xf32, #tpu.memory_space<vmem>>, vector<1x2x16x264xf32>,
    %c12_i32_16 = arith.constant 12 : i32
    %36 = vector.broadcast %c12_i32_16 : i32 to vector<1x1x264xi32>
    %37 = arith.addi %2, %36 : vector<1x1x264xi32>
    %c0_i32_17 = arith.constant 0 : i32
    %38 = vector.broadcast %c0_i32_17 : i32 to vector<1x1x264xi32>
    %39 = arith.cmpi sge, %37, %38 : vector<1x1x264xi32>
    %c264_i32_18 = arith.constant 264 : i32
    %40 = vector.broadcast %c264_i32_18 : i32 to vector<1x1x264xi32>
    %41 = arith.cmpi slt, %37, %40 : vector<1x1x264xi32>
    %42 = arith.andi %39, %41 : vector<1x1x264xi1>
    %c252_i32 = arith.constant 252 : i32
    %43 = tpu.dynamic_rotate %1 by %c252_i32 dim 2 : vector<2x16x264xf32>, i32 -> vector<2x16x264xf32>
    %cst_19 = arith.constant 0.000000e+00 : f32
    %44 = vector.shape_cast %42 : vector<1x1x264xi1> to vector<1x1x264xi1>
    %45 = vector.broadcast %44 : vector<1x1x264xi1> to vector<2x16x264xi1>
    %46 = vector.broadcast %cst_19 : f32 to vector<2x16x264xf32>
    %47 = arith.select %45, %43, %46 : vector<2x16x264xi1>, vector<2x16x264xf32>
    %c0_20 = arith.constant 0 : index
    %c6 = arith.constant 6 : index
    %c0_21 = arith.constant 0 : index
    %c0_22 = arith.constant 0 : index
    %48 = vector.load %arg3[%c0_20, %c6, %c0_21, %c0_22] : memref<1x10x16x264xf32, #tpu.memory_space<vmem>>, vector<1x2x16x264xf32>
    %49 = vector.shape_cast %48 : vector<1x2x16x264xf32> to vector<2x16x264xf32>
    %50 = vector.shape_cast %47 : vector<2x16x264xf32> to vector<1x2x16x264xf32>
    tpu.vector_store %arg3[%c0_20, %c6, %c0_21, %c0_22], %50 {strides = array<i32>} : memref<1x10x16x264xf32, #tpu.memory_space<vmem>>, vector<1x2x16x264xf32>,
    %c19_i32_23 = arith.constant 19 : i32
    %51 = vector.broadcast %c19_i32_23 : i32 to vector<1x1x264xi32>
    %52 = arith.addi %2, %51 : vector<1x1x264xi32>
    %c0_i32_24 = arith.constant 0 : i32
    %53 = vector.broadcast %c0_i32_24 : i32 to vector<1x1x264xi32>
    %54 = arith.cmpi sge, %52, %53 : vector<1x1x264xi32>
    %c264_i32_25 = arith.constant 264 : i32
    %55 = vector.broadcast %c264_i32_25 : i32 to vector<1x1x264xi32>
    %56 = arith.cmpi slt, %52, %55 : vector<1x1x264xi32>
    %57 = arith.andi %54, %56 : vector<1x1x264xi1>
    %c245_i32 = arith.constant 245 : i32
    %58 = tpu.dynamic_rotate %1 by %c245_i32 dim 2 : vector<2x16x264xf32>, i32 -> vector<2x16x264xf32>
    %cst_26 = arith.constant 0.000000e+00 : f32
    %59 = vector.shape_cast %57 : vector<1x1x264xi1> to vector<1x1x264xi1>
    %60 = vector.broadcast %59 : vector<1x1x264xi1> to vector<2x16x264xi1>
    %61 = vector.broadcast %cst_26 : f32 to vector<2x16x264xf32>
    %62 = arith.select %60, %58, %61 : vector<2x16x264xi1>, vector<2x16x264xf32>
    %c0_27 = arith.constant 0 : index
    %c8 = arith.constant 8 : index
    %c0_28 = arith.constant 0 : index
    %c0_29 = arith.constant 0 : index
    %63 = vector.load %arg3[%c0_27, %c8, %c0_28, %c0_29] : memref<1x10x16x264xf32, #tpu.memory_space<vmem>>, vector<1x2x16x264xf32>
    %64 = vector.shape_cast %63 : vector<1x2x16x264xf32> to vector<2x16x264xf32>
    %65 = vector.shape_cast %62 : vector<2x16x264xf32> to vector<1x2x16x264xf32>
    tpu.vector_store %arg3[%c0_27, %c8, %c0_28, %c0_29], %65 {strides = array<i32>} : memref<1x10x16x264xf32, #tpu.memory_space<vmem>>, vector<1x2x16x264xf32>,
    return
  }
  func.func @transform_0(%arg0: i32, %arg1: i32) -> (i32, i32, i32, i32) {
    %c0_i32 = arith.constant 0 : i32
    %c0_i32_0 = arith.constant 0 : i32
    %c0_i32_1 = arith.constant 0 : i32
    return %arg0, %c0_i32, %arg1, %c0_i32_0 : i32, i32, i32, i32
  }
  func.func @transform_1(%arg0: i32, %arg1: i32) -> (i32, i32, i32, i32) {
    %c0_i32 = arith.constant 0 : i32
    %c0_i32_0 = arith.constant 0 : i32
    %c0_i32_1 = arith.constant 0 : i32
    return %arg0, %c0_i32, %arg1, %c0_i32_0 : i32, i32, i32, i32
  }
}

</mosaic_0001>

<llo_original>
// kernel: tpu_custom_call.1
$region0: #{tpu_custom_call.1}
  #allocation0 [shape = 'u32[]', space=smem, size = 0x4, offset = 0x4, fixed_abs, tag = 'smem constant byte address 0x4 - core index']
  #allocation1 [shape = 'u32[72,128]{1,0:T(1,128)}', space=vmem, size = 0x9000, scoped, tag = 'internal scratch']
  %s0 = inlined_call_operand.hbm [shape: f32[2,2,16,264], index: 0, kind: input, shape index: {}]
  %s1 = inlined_call_operand.hbm [shape: f32[2,10,16,264], index: 1, kind: output, shape index: {}]
  %s2 = sld [smem:[#allocation0]]
  $region41: #{tpu_custom_call.1} parent=0
    _
  %s4 = ssub.s32 1, %s2
  %s5 = scalar_select 0, %s4, %s2
  $region1: #{tpu_custom_call.1} parent=0
    #allocation2 [shape = 'u8[98304]{0}', space=vmem, size = 0x18000, scoped, tag = 'input window, operand 0']
    #allocation3 [shape = 's32[2]{0}', space=sflag, size = 0x8, scoped, tag = 'scoped memory for tpu_custom_call.1']
    #allocation4 [shape = 's32[2]{0}', space=sflag, size = 0x8, scoped, tag = 'scoped memory for tpu_custom_call.1']
    #allocation5 [shape = 'u8[491520]{0}', space=vmem, size = 0x78000, scoped, tag = 'output window, operand 0']
    %6 = vsyncpa [#allocation3], 0
    %s7 = scalar_lea.sflag [#allocation3], 1
    %8 = vsyncpa %s7, 0
    %9 = vsyncpa [#allocation4], 0
    %s10 = scalar_lea.sflag [#allocation4], 1
    %11 = vsyncpa %s10, 0
    loop: start=0, step=1, limit=4
    $region2: #{tpu_custom_call.1} parent=1 // loop_pre_header
      _
    $region3: #{tpu_custom_call.1} parent=1 // loop_header
      %s13 = sphi 0, %s17
      %p14 = scmp.ge.s32.totalorder %s13, 4
      %s20 = sphi 0, %s32
      %s21 = sphi 0, %s28
      %s22 = sphi 0, %s20
      %s23 = sphi 0, %s21
      %s24 = sphi 0, %s22
      %s25 = sphi 0, %s23
      %s37 = sphi 0, %s39
      %s40 = sphi 0, %s37
      %s41 = sphi 0, %s40
      %s57 = sphi 0, %s41
      %s65 = sphi 0, %s67
      %s68 = sphi 0, %s65
      %s69 = sphi 0, %s68
      %s85 = sphi 0, %s69
    $region4: #{tpu_custom_call.1} parent=1 // loop_header_branch
      %16 = sbr.rel (%p14) target = $region8
    $region5: #{tpu_custom_call.1} parent=1 // loop_body
      %s18 = ssub.s32 %s13, 1
      %s19 = ssub.s32 %s13, 2
      %s26 = sadd.s32 1, %s21
      %p27 = scmp.ge.s32.totalorder %s26, 1
      %s28 = scalar_select %p27, 0, %s26
      %s29 = sadd.s32 1, %s20
      %s30 = scalar_select %p27, %s29, %s20
      %p31 = scmp.ge.s32.totalorder %s30, 2
      %s32 = scalar_select %p31, 0, %s30
      %s33 = ssub.s32 %s20, %s32
      %s34 = ssub.s32 %s21, %s28
      %s35 = sor.u32 %s33, %s34
      %p36 = scmp.eq.s32.totalorder %s35, 0
      %s38 = sadd.s32 %s37, 1
      %s39 = scalar_select %p36, %s37, %s38
      %p42 = pneg %p36
      %p43 = scmp.eq.s32.totalorder %s13, 1
      %p44 = por %p42, %p43
      %p45 = scmp.ne.s32.totalorder %s37, %s40
      %p46 = scmp.eq.s32.totalorder %s13, 0
      %p47 = por %p45, %p46
      %p48 = scmp.ne.s32.totalorder %s37, %s40
      %p49 = scmp.eq.s32.totalorder %s18, 1
      %p50 = por %p48, %p49
      %p51 = scmp.ne.s32.totalorder %s40, %s41
      %p52 = scmp.eq.s32.totalorder %s18, 0
      %p53 = por %p51, %p52
      %p54 = scmp.ne.s32.totalorder %s40, %s41
      %p55 = scmp.eq.s32.totalorder %s19, 1
      %p56 = por %p54, %p55
      %p58 = scmp.ne.s32.totalorder %s41, %s57
      %p59 = scmp.eq.s32.totalorder %s19, 0
      %p60 = por %p58, %p59
      %s61 = ssub.s32 %s20, %s32
      %s62 = ssub.s32 %s21, %s28
      %s63 = sor.u32 %s61, %s62
      %p64 = scmp.eq.s32.totalorder %s63, 0
      %s66 = sadd.s32 %s65, 1
      %s67 = scalar_select %p64, %s65, %s66
      %p70 = pneg %p64
      %p71 = scmp.eq.s32.totalorder %s13, 1
      %p72 = por %p70, %p71
      %p73 = scmp.ne.s32.totalorder %s65, %s68
      %p74 = scmp.eq.s32.totalorder %s13, 0
      %p75 = por %p73, %p74
      %p76 = scmp.ne.s32.totalorder %s65, %s68
      %p77 = scmp.eq.s32.totalorder %s18, 1
      %p78 = por %p76, %p77
      %p79 = scmp.ne.s32.totalorder %s68, %s69
      %p80 = scmp.eq.s32.totalorder %s18, 0
      %p81 = por %p79, %p80
      %p82 = scmp.ne.s32.totalorder %s68, %s69
      %p83 = scmp.eq.s32.totalorder %s19, 1
      %p84 = por %p82, %p83
      %p86 = scmp.ne.s32.totalorder %s69, %s85
      %p87 = scmp.eq.s32.totalorder %s19, 0
      %p88 = por %p86, %p87
      %p89 = scmp.le.s32.totalorder 1, %s13
      %p90 = scmp.lt.s32.totalorder %s13, 3
      %p91 = pnand %p89, %p90
      %p92 = pneg %p91
      // Predicated region
      $region9: #{tpu_custom_call.1} parent=5 // pred_check
        _
      $region10: #{tpu_custom_call.1} parent=5 // pred_check_branch
        %94 = sbr.rel (%p91) target = $region12
      $region11: #{tpu_custom_call.1} parent=5 // pred_region
        %s95 = ssub.s32 %s13, 1
      $region12: #{tpu_custom_call.1} parent=5 // pred_fallthru
        _
      %p96 = scmp.lt.s32.totalorder %s13, 2
      // Predicated region
      $region13: #{tpu_custom_call.1} parent=5 // pred_check
        %p97 = pneg %p96
      $region14: #{tpu_custom_call.1} parent=5 // pred_check_branch
        %99 = sbr.rel (%p97) target = $region16
      $region15: #{tpu_custom_call.1} parent=5 // pred_region
        // Predicated region
        $region17: #{tpu_custom_call.1} parent=15 // pred_check
          %p100 = pneg %p47
        $region18: #{tpu_custom_call.1} parent=15 // pred_check_branch
          %102 = sbr.rel (%p100) target = $region20
        $region19: #{tpu_custom_call.1} parent=15 // pred_region
          %s103 = sand.u32 %s37, 1
          %s104 = scalar_lea.sflag [#allocation3], %s103
          %s105 = sand.u32 %s37, 1
          %s106 = smul.addr %s105, 96
          %s107 = scalar_lea.vmem [#allocation2], %s106
          %s108 = smul.u32 2, %s21
          %110 = vsyncadd %s104, 0
          %s111 = smul.addr %s108, 3
          %s112 = smul.addr %s20, 12
          %s113 = sadd.s32 %s111, %s112
          %s114 = smul.addr %s113, 8
          %s115 = scalar_lea.hbm %s0, %s114
          %s116 = sshll.u32 %s115, 4
          %s117 = int_to_ptr.hbm [resolvable:$true] %s116
          %s118 = sshll.u32 %s107, 4
          %s119 = int_to_ptr.vmem [resolvable:$true] %s118
          %124 = dma.hbm_to_vmem [thread:$0]  %s117, 1536, %s119, %s104, 384, 384, 24
        $region20: #{tpu_custom_call.1} parent=15 // pred_fallthru
          _
      $region16: #{tpu_custom_call.1} parent=5 // pred_fallthru
        _
      %p125 = scmp.le.s32.totalorder 1, %s13
      %p126 = scmp.lt.s32.totalorder %s13, 3
      %p127 = pnand %p125, %p126
      %p128 = pneg %p127
      // Predicated region
      $region21: #{tpu_custom_call.1} parent=5 // pred_check
        _
      $region22: #{tpu_custom_call.1} parent=5 // pred_check_branch
        %130 = sbr.rel (%p127) target = $region24
      $region23: #{tpu_custom_call.1} parent=5 // pred_region
        %s131 = ssub.s32 %s13, 1
        %s132 = sand.u32 %s40, 1
        %s133 = scalar_lea.sflag [#allocation3], %s132
        %s134 = sand.u32 %s40, 1
        %s135 = smul.addr %s134, 96
        %s136 = scalar_lea.vmem [#allocation2], %s135
        // Predicated region
        $region25: #{tpu_custom_call.1} parent=23 // pred_check
          %p137 = pneg %p53
        $region26: #{tpu_custom_call.1} parent=23 // pred_check_branch
          %139 = sbr.rel (%p137) target = $region28
        $region27: #{tpu_custom_call.1} parent=23 // pred_region
          %141 = dma.done %s133, 1536
        $region28: #{tpu_custom_call.1} parent=23 // pred_fallthru
          _
        %s142 = sand.u32 %s40, 1
        %s143 = scalar_lea.sflag [#allocation3], %s142
        %s144 = sand.u32 %s40, 1
        %s145 = smul.addr %s144, 96
        %s146 = scalar_lea.vmem [#allocation2], %s145
        %p147 = pneg %p53
        %p148 = pneg %p50
        %p149 = pneg %p81
        %p150 = pneg %p78
        %s151 = sand.u32 %s68, 1
        %s152 = scalar_lea.sflag [#allocation4], %s151
        %s153 = sand.u32 %s68, 1
        %s154 = smul.addr %s153, 480
        %s155 = scalar_lea.vmem [#allocation5], %s154
        %s156 = smul.u32 2, %s23
        %s157 = smul.u32 2, %s23
        %v158 = vld [vmem:[%s136] sm:$0xff]
        %v159 = vld [vmem:[%s136 + $0x8] sm:$0xff]
        %v160 = vld [vmem:[%s136 + $0x10] sm:$0xff]
        %v161 = vld [vmem:[%s136 + $0x18] sm:$0xff]
        %v162 = vld [vmem:[%s136 + $0x20] sm:$0xff]
        %v163 = vld [vmem:[%s136 + $0x28] sm:$0xff]
        %v164 = vld [vmem:[%s136 + $0x30] sm:$0xff]
        %v165 = vld [vmem:[%s136 + $0x38] sm:$0xff]
        %v166 = vld [vmem:[%s136 + $0x40] sm:$0xff]
        %v167 = vld [vmem:[%s136 + $0x48] sm:$0xff]
        %v168 = vld [vmem:[%s136 + $0x50] sm:$0xff]
        %v169 = vld [vmem:[%s136 + $0x58] sm:$0xff]
        %v170 = vlaneseq
        %v171 = vand.u32 %v170, 127
        %v172 = vadd.s32 %v171, 128
        %v173 = vadd.s32 %v171, 256
        %v174 = vadd.s32 %v171, 4294967284
        %v175 = vadd.s32 %v172, 4294967284
        %v176 = vadd.s32 %v173, 4294967284
        %vm177 = vcmp.ge.s32.totalorder %v174, 0
        %vm178 = vcmp.ge.s32.totalorder %v175, 0
        %vm179 = vcmp.ge.s32.totalorder %v176, 0
        %vm180 = vcmp.lt.s32.totalorder %v174, 264
        %vm181 = vcmp.lt.s32.totalorder %v175, 264
        %vm182 = vcmp.lt.s32.totalorder %v176, 264
        %vm183 = vmand %vm177, %vm180
        %vm184 = vmand %vm178, %vm181
        %vm185 = vmand %vm179, %vm182
        %vm186 = vcmask 1047616
        %187 = vrot.lane.b32.xlu0 %v158, 8
        %v188 = vpop.permute.xlu0 %187
        %v189 = vsel %vm186, %v188, %v160
        %190 = vrot.lane.b32.xlu0 %v161, 8
        %v191 = vpop.permute.xlu0 %190
        %v192 = vsel %vm186, %v191, %v163
        %193 = vrot.lane.b32.xlu0 %v164, 8
        %v194 = vpop.permute.xlu0 %193
        %v195 = vsel %vm186, %v194, %v166
        %196 = vrot.lane.b32.xlu0 %v167, 8
        %v197 = vpop.permute.xlu0 %196
        %v198 = vsel %vm186, %v197, %v169
        %199 = vrot.lane.b32.xlu0 %v159, 8
        %v200 = vpop.permute.xlu0 %199
        %201 = vrot.lane.b32.xlu0 %v162, 8
        %v202 = vpop.permute.xlu0 %201
        %203 = vrot.lane.b32.xlu0 %v165, 8
        %v204 = vpop.permute.xlu0 %203
        %205 = vrot.lane.b32.xlu0 %v168, 8
        %v206 = vpop.permute.xlu0 %205
        %207 = vrot.lane.b32.xlu0 %v189, 8
        %v208 = vpop.permute.xlu0 %207
        %209 = vrot.lane.b32.xlu0 %v192, 8
        %v210 = vpop.permute.xlu0 %209
        %211 = vrot.lane.b32.xlu0 %v195, 8
        %v212 = vpop.permute.xlu0 %211
        %213 = vrot.lane.b32.xlu0 %v198, 8
        %v214 = vpop.permute.xlu0 %213
        %v215 = vsel %vm186, %v200, %v188
        %v216 = vsel %vm186, %v202, %v191
        %v217 = vsel %vm186, %v204, %v194
        %v218 = vsel %vm186, %v206, %v197
        %v219 = vsel %vm186, %v208, %v200
        %v220 = vsel %vm186, %v210, %v202
        %v221 = vsel %vm186, %v212, %v204
        %v222 = vsel %vm186, %v214, %v206
        %v223 = vsel %vm183, 1, 0
        %v224 = vsel %vm184, 1, 0
        %v225 = vsel %vm185, 1, 0
        %vm226 = vcmp.eq.s32.totalorder %v223, 1
        %vm227 = vcmp.eq.s32.totalorder %v224, 1
        %vm228 = vcmp.eq.s32.totalorder %v225, 1
        %245 = vrot.lane.b32.xlu0 %v159, 4
        %v246 = vpop.permute.xlu0 %245
        %247 = vrot.lane.b32.xlu0 %v189, 4
        %v248 = vpop.permute.xlu0 %247
        %249 = vrot.lane.b32.xlu0 %v215, 4
        %v250 = vpop.permute.xlu0 %249
        %251 = vrot.lane.b32.xlu0 %v219, 4
        %v252 = vpop.permute.xlu0 %251
        %253 = vrot.lane.b32.xlu0 %v162, 4
        %v254 = vpop.permute.xlu0 %253
        %255 = vrot.lane.b32.xlu0 %v192, 4
        %v256 = vpop.permute.xlu0 %255
        %257 = vrot.lane.b32.xlu0 %v216, 4
        %v258 = vpop.permute.xlu0 %257
        %259 = vrot.lane.b32.xlu0 %v220, 4
        %v260 = vpop.permute.xlu0 %259
        %261 = vrot.lane.b32.xlu0 %v165, 4
        %v262 = vpop.permute.xlu0 %261
        %263 = vrot.lane.b32.xlu0 %v195, 4
        %v264 = vpop.permute.xlu0 %263
        %265 = vrot.lane.b32.xlu0 %v217, 4
        %v266 = vpop.permute.xlu0 %265
        %267 = vrot.lane.b32.xlu0 %v221, 4
        %v268 = vpop.permute.xlu0 %267
        %269 = vrot.lane.b32.xlu0 %v168, 4
        %v270 = vpop.permute.xlu0 %269
        %271 = vrot.lane.b32.xlu0 %v198, 4
        %v272 = vpop.permute.xlu0 %271
        %273 = vrot.lane.b32.xlu0 %v218, 4
        %v274 = vpop.permute.xlu0 %273
        %275 = vrot.lane.b32.xlu0 %v222, 4
        %v276 = vpop.permute.xlu0 %275
        %vm277 = vcmask 31744
        %v278 = vsel %vm277, %v246, %v248
        %v279 = vsel %vm277, %v248, %v250
        %v280 = vsel %vm277, %v250, %v252
        %v281 = vsel %vm277, %v254, %v256
        %v282 = vsel %vm277, %v256, %v258
        %v283 = vsel %vm277, %v258, %v260
        %v284 = vsel %vm277, %v262, %v264
        %v285 = vsel %vm277, %v264, %v266
        %v286 = vsel %vm277, %v266, %v268
        %v287 = vsel %vm277, %v270, %v272
        %v288 = vsel %vm277, %v272, %v274
        %v289 = vsel %vm277, %v274, %v276
        %v302 = vsel %vm226, %v278, 0.0
        %v303 = vsel %vm227, %v279, 0.0
        %v304 = vsel %vm228, %v280, 0.0
        %v305 = vsel %vm226, %v281, 0.0
        %v306 = vsel %vm227, %v282, 0.0
        %v307 = vsel %vm228, %v283, 0.0
        %v308 = vsel %vm226, %v284, 0.0
        %v309 = vsel %vm227, %v285, 0.0
        %v310 = vsel %vm228, %v286, 0.0
        %v311 = vsel %vm226, %v287, 0.0
        %v312 = vsel %vm227, %v288, 0.0
        %v313 = vsel %vm228, %v289, 0.0
        %314 = vst [vmem:[%s155] sm:$0xff] %v302
        %315 = vst [vmem:[%s155 + $0x8] sm:$0xff] %v303
        %vm316 = vcmask 64512
        %317 = vst.msk [vmem:[%s155 + $0x10] sm:$0xff] %vm316, %v304
        %318 = vst [vmem:[%s155 + $0x18] sm:$0xff] %v305
        %319 = vst [vmem:[%s155 + $0x20] sm:$0xff] %v306
        %320 = vst.msk [vmem:[%s155 + $0x28] sm:$0xff] %vm316, %v307
        %321 = vst [vmem:[%s155 + $0x30] sm:$0xff] %v308
        %322 = vst [vmem:[%s155 + $0x38] sm:$0xff] %v309
        %323 = vst.msk [vmem:[%s155 + $0x40] sm:$0xff] %vm316, %v310
        %324 = vst [vmem:[%s155 + $0x48] sm:$0xff] %v311
        %325 = vst [vmem:[%s155 + $0x50] sm:$0xff] %v312
        %326 = vst.msk [vmem:[%s155 + $0x58] sm:$0xff] %vm316, %v313
        %v327 = vadd.s32 %v171, 4294967277
        %v328 = vadd.s32 %v172, 4294967277
        %v329 = vadd.s32 %v173, 4294967277
        %vm330 = vcmp.ge.s32.totalorder %v327, 0
        %vm331 = vcmp.ge.s32.totalorder %v328, 0
        %vm332 = vcmp.ge.s32.totalorder %v329, 0
        %vm333 = vcmp.lt.s32.totalorder %v327, 264
        %vm334 = vcmp.lt.s32.totalorder %v328, 264
        %vm335 = vcmp.lt.s32.totalorder %v329, 264
        %vm336 = vmand %vm330, %vm333
        %vm337 = vmand %vm331, %vm334
        %vm338 = vmand %vm332, %vm335
        %v339 = vsel %vm336, 1, 0
        %v340 = vsel %vm337, 1, 0
        %v341 = vsel %vm338, 1, 0
        %vm342 = vcmp.eq.s32.totalorder %v339, 1
        %vm343 = vcmp.eq.s32.totalorder %v340, 1
        %vm344 = vcmp.eq.s32.totalorder %v341, 1
        %345 = vrot.lane.b32.xlu0 %v159, 11
        %v346 = vpop.permute.xlu0 %345
        %347 = vrot.lane.b32.xlu0 %v189, 11
        %v348 = vpop.permute.xlu0 %347
        %349 = vrot.lane.b32.xlu0 %v215, 11
        %v350 = vpop.permute.xlu0 %349
        %351 = vrot.lane.b32.xlu0 %v162, 11
        %v352 = vpop.permute.xlu0 %351
        %353 = vrot.lane.b32.xlu0 %v192, 11
        %v354 = vpop.permute.xlu0 %353
        %355 = vrot.lane.b32.xlu0 %v216, 11
        %v356 = vpop.permute.xlu0 %355
        %357 = vrot.lane.b32.xlu0 %v165, 11
        %v358 = vpop.permute.xlu0 %357
        %359 = vrot.lane.b32.xlu0 %v195, 11
        %v360 = vpop.permute.xlu0 %359
        %361 = vrot.lane.b32.xlu0 %v217, 11
        %v362 = vpop.permute.xlu0 %361
        %363 = vrot.lane.b32.xlu0 %v168, 11
        %v364 = vpop.permute.xlu0 %363
        %365 = vrot.lane.b32.xlu0 %v198, 11
        %v366 = vpop.permute.xlu0 %365
        %367 = vrot.lane.b32.xlu0 %v218, 11
        %v368 = vpop.permute.xlu0 %367
        %vm369 = vcmask 89088
        %v370 = vsel %vm369, %v346, %v348
        %v371 = vsel %vm369, %v348, %v350
        %v372 = vsel %vm369, %v352, %v354
        %v373 = vsel %vm369, %v354, %v356
        %v374 = vsel %vm369, %v358, %v360
        %v375 = vsel %vm369, %v360, %v362
        %v376 = vsel %vm369, %v364, %v366
        %v377 = vsel %vm369, %v366, %v368
        %v390 = vsel %vm342, %v370, 0.0
        %v391 = vsel %vm343, %v371, 0.0
        %v392 = vsel %vm344, %v350, 0.0
        %v393 = vsel %vm342, %v372, 0.0
        %v394 = vsel %vm343, %v373, 0.0
        %v395 = vsel %vm344, %v356, 0.0
        %v396 = vsel %vm342, %v374, 0.0
        %v397 = vsel %vm343, %v375, 0.0
        %v398 = vsel %vm344, %v362, 0.0
        %v399 = vsel %vm342, %v376, 0.0
        %v400 = vsel %vm343, %v377, 0.0
        %v401 = vsel %vm344, %v368, 0.0
        %s402 = scalar_lea.vmem %s155, 96 [#allocation5]
        %403 = vst [vmem:[%s402] sm:$0xff] %v390
        %404 = vst [vmem:[%s402 + $0x8] sm:$0xff] %v391
        %405 = vst.msk [vmem:[%s402 + $0x10] sm:$0xff] %vm316, %v392
        %406 = vst [vmem:[%s402 + $0x18] sm:$0xff] %v393
        %407 = vst [vmem:[%s402 + $0x20] sm:$0xff] %v394
        %408 = vst.msk [vmem:[%s402 + $0x28] sm:$0xff] %vm316, %v395
        %409 = vst [vmem:[%s402 + $0x30] sm:$0xff] %v396
        %410 = vst [vmem:[%s402 + $0x38] sm:$0xff] %v397
        %411 = vst.msk [vmem:[%s402 + $0x40] sm:$0xff] %vm316, %v398
        %412 = vst [vmem:[%s402 + $0x48] sm:$0xff] %v399
        %413 = vst [vmem:[%s402 + $0x50] sm:$0xff] %v400
        %414 = vst.msk [vmem:[%s402 + $0x58] sm:$0xff] %vm316, %v401
        %s415 = scalar_lea.vmem %s155, 192 [#allocation5]
        %416 = vst [vmem:[%s415] sm:$0xff] %v158
        %417 = vst [vmem:[%s415 + $0x8] sm:$0xff] %v159
        %418 = vst.msk [vmem:[%s415 + $0x10] sm:$0xff] %vm316, %v160
        %419 = vst [vmem:[%s415 + $0x18] sm:$0xff] %v161
        %420 = vst [vmem:[%s415 + $0x20] sm:$0xff] %v162
        %421 = vst.msk [vmem:[%s415 + $0x28] sm:$0xff] %vm316, %v163
        %422 = vst [vmem:[%s415 + $0x30] sm:$0xff] %v164
        %423 = vst [vmem:[%s415 + $0x38] sm:$0xff] %v165
        %424 = vst.msk [vmem:[%s415 + $0x40] sm:$0xff] %vm316, %v166
        %425 = vst [vmem:[%s415 + $0x48] sm:$0xff] %v167
        %426 = vst [vmem:[%s415 + $0x50] sm:$0xff] %v168
        %427 = vst.msk [vmem:[%s415 + $0x58] sm:$0xff] %vm316, %v169
        %v428 = vadd.s32 %v171, 12
        %v429 = vadd.s32 %v172, 12
        %v430 = vadd.s32 %v173, 12
        %vm431 = vcmp.ge.s32.totalorder %v428, 0
        %vm432 = vcmp.ge.s32.totalorder %v429, 0
        %vm433 = vcmp.ge.s32.totalorder %v430, 0
        %vm434 = vcmp.lt.s32.totalorder %v428, 264
        %vm435 = vcmp.lt.s32.totalorder %v429, 264
        %vm436 = vcmp.lt.s32.totalorder %v430, 264
        %vm437 = vmand %vm431, %vm434
        %vm438 = vmand %vm432, %vm435
        %vm439 = vmand %vm433, %vm436
        %v440 = vsel %vm437, 1, 0
        %v441 = vsel %vm438, 1, 0
        %v442 = vsel %vm439, 1, 0
        %vm443 = vcmp.eq.s32.totalorder %v440, 1
        %vm444 = vcmp.eq.s32.totalorder %v441, 1
        %vm445 = vcmp.eq.s32.totalorder %v442, 1
        %450 = vrot.lane.b32.xlu0 %v158, 116
        %v451 = vpop.permute.xlu0 %450
        %452 = vrot.lane.b32.xlu0 %v159, 116
        %v453 = vpop.permute.xlu0 %452
        %454 = vrot.lane.b32.xlu0 %v189, 116
        %v455 = vpop.permute.xlu0 %454
        %456 = vrot.lane.b32.xlu0 %v161, 116
        %v457 = vpop.permute.xlu0 %456
        %458 = vrot.lane.b32.xlu0 %v162, 116
        %v459 = vpop.permute.xlu0 %458
        %460 = vrot.lane.b32.xlu0 %v192, 116
        %v461 = vpop.permute.xlu0 %460
        %462 = vrot.lane.b32.xlu0 %v164, 116
        %v463 = vpop.permute.xlu0 %462
        %464 = vrot.lane.b32.xlu0 %v165, 116
        %v465 = vpop.permute.xlu0 %464
        %466 = vrot.lane.b32.xlu0 %v195, 116
        %v467 = vpop.permute.xlu0 %466
        %468 = vrot.lane.b32.xlu0 %v167, 116
        %v469 = vpop.permute.xlu0 %468
        %470 = vrot.lane.b32.xlu0 %v168, 116
        %v471 = vpop.permute.xlu0 %470
        %472 = vrot.lane.b32.xlu0 %v198, 116
        %v473 = vpop.permute.xlu0 %472
        %vm474 = vcmask 949248
        %v475 = vsel %vm474, %v451, %v453
        %v476 = vsel %vm474, %v453, %v455
        %v477 = vsel %vm474, %v457, %v459
        %v478 = vsel %vm474, %v459, %v461
        %v479 = vsel %vm474, %v463, %v465
        %v480 = vsel %vm474, %v465, %v467
        %v481 = vsel %vm474, %v469, %v471
        %v482 = vsel %vm474, %v471, %v473
        %v495 = vsel %vm443, %v475, 0.0
        %v496 = vsel %vm444, %v476, 0.0
        %v497 = vsel %vm445, %v455, 0.0
        %v498 = vsel %vm443, %v477, 0.0
        %v499 = vsel %vm444, %v478, 0.0
        %v500 = vsel %vm445, %v461, 0.0
        %v501 = vsel %vm443, %v479, 0.0
        %v502 = vsel %vm444, %v480, 0.0
        %v503 = vsel %vm445, %v467, 0.0
        %v504 = vsel %vm443, %v481, 0.0
        %v505 = vsel %vm444, %v482, 0.0
        %v506 = vsel %vm445, %v473, 0.0
        %s507 = scalar_lea.vmem %s155, 288 [#allocation5]
        %508 = vst [vmem:[%s507] sm:$0xff] %v495
        %509 = vst [vmem:[%s507 + $0x8] sm:$0xff] %v496
        %510 = vst.msk [vmem:[%s507 + $0x10] sm:$0xff] %vm316, %v497
        %511 = vst [vmem:[%s507 + $0x18] sm:$0xff] %v498
        %512 = vst [vmem:[%s507 + $0x20] sm:$0xff] %v499
        %513 = vst.msk [vmem:[%s507 + $0x28] sm:$0xff] %vm316, %v500
        %514 = vst [vmem:[%s507 + $0x30] sm:$0xff] %v501
        %515 = vst [vmem:[%s507 + $0x38] sm:$0xff] %v502
        %516 = vst.msk [vmem:[%s507 + $0x40] sm:$0xff] %vm316, %v503
        %517 = vst [vmem:[%s507 + $0x48] sm:$0xff] %v504
        %518 = vst [vmem:[%s507 + $0x50] sm:$0xff] %v505
        %519 = vst.msk [vmem:[%s507 + $0x58] sm:$0xff] %vm316, %v506
        %v520 = vadd.s32 %v171, 19
        %v521 = vadd.s32 %v172, 19
        %v522 = vadd.s32 %v173, 19
        %vm523 = vcmp.ge.s32.totalorder %v520, 0
        %vm524 = vcmp.ge.s32.totalorder %v521, 0
        %vm525 = vcmp.ge.s32.totalorder %v522, 0
        %vm526 = vcmp.lt.s32.totalorder %v520, 264
        %vm527 = vcmp.lt.s32.totalorder %v521, 264
        %vm528 = vcmp.lt.s32.totalorder %v522, 264
        %vm529 = vmand %vm523, %vm526
        %vm530 = vmand %vm524, %vm527
        %vm531 = vmand %vm525, %vm528
        %v532 = vsel %vm529, 1, 0
        %v533 = vsel %vm530, 1, 0
        %v534 = vsel %vm531, 1, 0
        %vm535 = vcmp.eq.s32.totalorder %v532, 1
        %vm536 = vcmp.eq.s32.totalorder %v533, 1
        %vm537 = vcmp.eq.s32.totalorder %v534, 1
        %538 = vrot.lane.b32.xlu0 %v158, 109
        %v539 = vpop.permute.xlu0 %538
        %540 = vrot.lane.b32.xlu0 %v159, 109
        %v541 = vpop.permute.xlu0 %540
        %542 = vrot.lane.b32.xlu0 %v189, 109
        %v543 = vpop.permute.xlu0 %542
        %544 = vrot.lane.b32.xlu0 %v161, 109
        %v545 = vpop.permute.xlu0 %544
        %546 = vrot.lane.b32.xlu0 %v162, 109
        %v547 = vpop.permute.xlu0 %546
        %548 = vrot.lane.b32.xlu0 %v192, 109
        %v549 = vpop.permute.xlu0 %548
        %550 = vrot.lane.b32.xlu0 %v164, 109
        %v551 = vpop.permute.xlu0 %550
        %552 = vrot.lane.b32.xlu0 %v165, 109
        %v553 = vpop.permute.xlu0 %552
        %554 = vrot.lane.b32.xlu0 %v195, 109
        %v555 = vpop.permute.xlu0 %554
        %556 = vrot.lane.b32.xlu0 %v167, 109
        %v557 = vpop.permute.xlu0 %556
        %558 = vrot.lane.b32.xlu0 %v168, 109
        %v559 = vpop.permute.xlu0 %558
        %560 = vrot.lane.b32.xlu0 %v198, 109
        %v561 = vpop.permute.xlu0 %560
        %vm562 = vcmask 891904
        %v563 = vsel %vm562, %v539, %v541
        %v564 = vsel %vm562, %v541, %v543
        %v565 = vsel %vm562, %v545, %v547
        %v566 = vsel %vm562, %v547, %v549
        %v567 = vsel %vm562, %v551, %v553
        %v568 = vsel %vm562, %v553, %v555
        %v569 = vsel %vm562, %v557, %v559
        %v570 = vsel %vm562, %v559, %v561
        %v583 = vsel %vm535, %v563, 0.0
        %v584 = vsel %vm536, %v564, 0.0
        %v585 = vsel %vm537, %v543, 0.0
        %v586 = vsel %vm535, %v565, 0.0
        %v587 = vsel %vm536, %v566, 0.0
        %v588 = vsel %vm537, %v549, 0.0
        %v589 = vsel %vm535, %v567, 0.0
        %v590 = vsel %vm536, %v568, 0.0
        %v591 = vsel %vm537, %v555, 0.0
        %v592 = vsel %vm535, %v569, 0.0
        %v593 = vsel %vm536, %v570, 0.0
        %v594 = vsel %vm537, %v561, 0.0
        %s595 = scalar_lea.vmem %s155, 384 [#allocation5]
        %596 = vst [vmem:[%s595] sm:$0xff] %v583
        %597 = vst [vmem:[%s595 + $0x8] sm:$0xff] %v584
        %598 = vst.msk [vmem:[%s595 + $0x10] sm:$0xff] %vm316, %v585
        %599 = vst [vmem:[%s595 + $0x18] sm:$0xff] %v586
        %600 = vst [vmem:[%s595 + $0x20] sm:$0xff] %v587
        %601 = vst.msk [vmem:[%s595 + $0x28] sm:$0xff] %vm316, %v588
        %602 = vst [vmem:[%s595 + $0x30] sm:$0xff] %v589
        %603 = vst [vmem:[%s595 + $0x38] sm:$0xff] %v590
        %604 = vst.msk [vmem:[%s595 + $0x40] sm:$0xff] %vm316, %v591
        %605 = vst [vmem:[%s595 + $0x48] sm:$0xff] %v592
        %606 = vst [vmem:[%s595 + $0x50] sm:$0xff] %v593
        %607 = vst.msk [vmem:[%s595 + $0x58] sm:$0xff] %vm316, %v594
        %s608 = sand.u32 %s68, 1
        %s609 = scalar_lea.sflag [#allocation4], %s608
        %s610 = sand.u32 %s68, 1
        %s611 = smul.addr %s610, 480
        %s612 = scalar_lea.vmem [#allocation5], %s611
        // Predicated region
        $region29: #{tpu_custom_call.1} parent=23 // pred_check
          %p613 = pneg %p78
        $region30: #{tpu_custom_call.1} parent=23 // pred_check_branch
          %615 = sbr.rel (%p613) target = $region32
        $region31: #{tpu_custom_call.1} parent=23 // pred_region
          %s616 = smul.u32 2, %s23
          %618 = vsyncadd %s609, 0
          %s619 = smul.addr %s616, 3
          %s620 = smul.addr %s22, 60
          %s621 = sadd.s32 %s619, %s620
          %s622 = smul.addr %s621, 8
          %s623 = scalar_lea.hbm %s1, %s622
          %s624 = sshll.u32 %s612, 4
          %s625 = int_to_ptr.vmem [resolvable:$true] %s624
          %s626 = sshll.u32 %s623, 4
          %s627 = int_to_ptr.hbm [resolvable:$true] %s626
          %632 = dma.vmem_to_hbm [thread:$0]  %s625, 7680, %s627, %s609, 384, 384, 24
        $region32: #{tpu_custom_call.1} parent=23 // pred_fallthru
          _
      $region24: #{tpu_custom_call.1} parent=5 // pred_fallthru
        _
      %p633 = scmp.le.s32.totalorder 2, %s13
      // Predicated region
      $region33: #{tpu_custom_call.1} parent=5 // pred_check
        %p634 = pneg %p633
      $region34: #{tpu_custom_call.1} parent=5 // pred_check_branch
        %636 = sbr.rel (%p634) target = $region36
      $region35: #{tpu_custom_call.1} parent=5 // pred_region
        %s637 = ssub.s32 %s13, 2
        // Predicated region
        $region37: #{tpu_custom_call.1} parent=35 // pred_check
          %p638 = pneg %p84
        $region38: #{tpu_custom_call.1} parent=35 // pred_check_branch
          %640 = sbr.rel (%p638) target = $region40
        $region39: #{tpu_custom_call.1} parent=35 // pred_region
          %s641 = sand.u32 %s69, 1
          %s642 = scalar_lea.sflag [#allocation4], %s641
          %s643 = sand.u32 %s69, 1
          %s644 = smul.addr %s643, 480
          %s645 = scalar_lea.vmem [#allocation5], %s644
          %647 = dma.done %s642, 7680
        $region40: #{tpu_custom_call.1} parent=35 // pred_fallthru
          _
      $region36: #{tpu_custom_call.1} parent=5 // pred_fallthru
        _
    $region6: #{tpu_custom_call.1} parent=1 // loop_footer
      %s17 = sadd.s32 1, %s13
    $region7: #{tpu_custom_call.1} parent=1 // loop_footer_branch
      %12 = sbr.rel target = $region3
    $region8: #{tpu_custom_call.1} parent=1 // loop_exit
      _
    %648 = vsyncpa [#allocation3], 1
    %s649 = scalar_lea.sflag [#allocation3], 1
    %650 = vsyncpa %s649, 1
    %651 = vsyncpa [#allocation4], 1
    %s652 = scalar_lea.sflag [#allocation4], 1
    %653 = vsyncpa %s652, 1

</llo_original>
